<compile_context>
chip_gen: v5e
topology: v5e:2x2
jax: 0.10.0
libtpu: 0.0.40
codegen_flags: <defaults>
</compile_context>

<pallas_src>
import functools

import jax
import jax.numpy as jnp
import numpy as np
from jax.experimental import pallas as pl
from jax.experimental.pallas import tpu as pltpu

LANES = 128


def _round_up(x, m):
    return ((x + m - 1) // m) * m


def _device_kind():
    try:
        return jax.devices()[0].device_kind.lower()
    except Exception:
        return ""


def _quantile_sums_kernel(inp_ref, tgt_ref, s1_ref, s2_ref, *,
                          rows_total, tile_rows, steps_per_split, needs_mask):
    """grid = (num_splits, steps_per_split).

    s1_ref / s2_ref are resident (1, LANES) per-split accumulators:
      s1 += sum(d)        with d = input - target
      s2 += sum(relu(d))
    Cross-lane / cross-split reduce and the quantile are applied in the wrapper.
    """
    split = pl.program_id(0)
    step = pl.program_id(1)

    @pl.when(step == 0)
    def _():
        s1_ref[...] = jnp.zeros_like(s1_ref)
        s2_ref[...] = jnp.zeros_like(s2_ref)

    # Stream native dtypes from HBM; do the math in f32 on the VPU.
    d = inp_ref[...].astype(jnp.float32) - tgt_ref[...].astype(jnp.float32)

    def accumulate(v):
        # Sublane-only reduce per step (XLU slot, hidden under the DMA);
        # cross-lane reduce is deferred to the wrapper.
        s1_ref[...] += jnp.sum(v, axis=0, keepdims=True)
        s2_ref[...] += jnp.sum(jnp.maximum(v, 0.0), axis=0, keepdims=True)

    if not needs_mask:
        accumulate(d)
    else:
        block_pos = split * steps_per_split + step
        valid_rows = rows_total - block_pos * tile_rows

        @pl.when(valid_rows >= tile_rows)
        def _():                      # full block: no masking cost
            accumulate(d)

        @pl.when(valid_rows < tile_rows)
        def _():                      # partial / duplicate block: mask rows
            row_ids = jax.lax.broadcasted_iota(jnp.int32, d.shape, 0)
            # select (never multiply -- undefined data could be Inf/NaN)
            accumulate(jnp.where(row_ids < valid_rows, d, 0.0))


def quantile_loss(input_arr, target_arr, quantile_val, *, block_rows=None):
    """Pallas implementation of QuantileLoss(quantile_val)(input, target)."""
    assert input_arr.shape == target_arr.shape, (
        f"target shape: {target_arr.shape}, but input shape: {input_arr.shape}"
    )
    n = input_arr.size
    inp = jnp.ravel(input_arr)
    tgt = jnp.ravel(target_arr)

    # Stream each array in its own native dtype (f32/bf16/f16); anything else
    # is cast to f32.  No forcing the two dtypes to match (no extra HBM pass).
    def _native(a):
        if any(a.dtype == d for d in (jnp.float32, jnp.bfloat16, jnp.float16)):
            return a
        return a.astype(jnp.float32)

    inp = _native(inp)
    tgt = _native(tgt)

    kind = _device_kind()
    # 2-way split only where there are 2 TensorCores per chip.
    num_splits = 2 if any(t in kind for t in ("v7", "v5p", "v4")) else 1
    old_gen = ("v2" in kind) or ("v3" in kind)   # tiny VMEM: stay conservative

    itemsizes = (inp.dtype.itemsize, tgt.dtype.itemsize)
    sublane = 16 if min(itemsizes) == 2 else 8
    # ~4 MiB per input block on v5e/v6e/v7x (1 MiB on old small-VMEM parts).
    target_block_bytes = (1 << 20) if old_gen else (4 << 20)
    default_tile_rows = max(sublane, target_block_bytes // (LANES * max(itemsizes)))
    if block_rows is not None:
        default_tile_rows = _round_up(int(block_rows), sublane)

    # Lane alignment: only pad when N % 128 != 0 (pad < 128 zeros, which
    # contribute exactly 0 to both S1 and S2).  Otherwise the reshape below is
    # a free bitcast -- no extra HBM pass before the kernel.
    rem = n % LANES
    if rem:
        pad = LANES - rem
        inp = jnp.pad(inp, (0, pad))
        tgt = jnp.pad(tgt, (0, pad))
    rows = inp.shape[0] // LANES
    inp2 = inp.reshape(rows, LANES)
    tgt2 = tgt.reshape(rows, LANES)

    tile_rows = min(default_tile_rows, _round_up(rows, sublane))
    row_blocks = pl.cdiv(rows, tile_rows)
    steps_per_split = pl.cdiv(row_blocks, num_splits)
    needs_mask = (rows % tile_rows != 0) or (num_splits * steps_per_split != row_blocks)

    if num_splits > 1 and num_splits * steps_per_split != row_blocks:
        # Clamp so every DMA stays in bounds; the clamped (duplicate) block is
        # fully zeroed by the in-kernel mask.
        def in_map(c, i):
            return (jnp.minimum(c * steps_per_split + i, row_blocks - 1), 0)
    else:
        def in_map(c, i):
            return (c * steps_per_split + i, 0)

    kernel = functools.partial(
        _quantile_sums_kernel,
        rows_total=rows,
        tile_rows=tile_rows,
        steps_per_split=steps_per_split,
        needs_mask=needs_mask,
    )

    s1, s2 = pl.pallas_call(
        kernel,
        out_shape=(
            jax.ShapeDtypeStruct((num_splits, 1, LANES), jnp.float32),
            jax.ShapeDtypeStruct((num_splits, 1, LANES), jnp.float32),
        ),
        grid_spec=pltpu.PrefetchScalarGridSpec(
            num_scalar_prefetch=0,
            grid=(num_splits, steps_per_split),
            in_specs=[
                pl.BlockSpec((tile_rows, LANES), in_map),
                pl.BlockSpec((tile_rows, LANES), in_map),
            ],
            out_specs=[
                pl.BlockSpec((None, 1, LANES), lambda c, i: (c, 0, 0)),
                pl.BlockSpec((None, 1, LANES), lambda c, i: (c, 0, 0)),
            ],
        ),
        compiler_params=pltpu.CompilerParams(
            dimension_semantics=("parallel", "arbitrary"),
            # 2 inputs x 2 pipeline buffers x <=4 MiB = <=16 MiB; 32 MiB limit
            # is safe on v5e/v6e and within v7x's 64 MiB physical VMEM.
            vmem_limit_bytes=None if old_gen else 32 * 1024 * 1024,
        ),
    )(inp2, tgt2)

    # Tiny epilogue: cross-lane / cross-split reduce, apply quantile, mean.
    total = jnp.sum(s2) - quantile_val * jnp.sum(s1)
    return total / n


if __name__ == "__main__":
    key = jax.random.PRNGKey(0)
    k1, k2, k3, k4 = jax.random.split(key, 4)
    QUANTILE = 0.7

    def ref_loss(pred, target, q):
        residual = target.astype(jnp.float32) - pred.astype(jnp.float32)
        return jnp.mean(jnp.maximum(q * residual, (q - 1.0) * residual))

    # 1) Small, lane-unaligned 1-D tensors (exercises pad path, single block).
    n1 = 2000
    pred1 = jax.random.normal(k1, (n1,), dtype=jnp.float32)
    tgt1 = jax.random.normal(k2, (n1,), dtype=jnp.float32)
    out1 = jax.block_until_ready(quantile_loss(pred1, tgt1, QUANTILE))
    assert np.allclose(np.asarray(out1), np.asarray(ref_loss(pred1, tgt1, QUANTILE)),
                       rtol=1e-5, atol=1e-6)

    # 2) Multi-step grid with a partial (masked) last block, forced via a small
    #    block_rows override so the path is tested at small size.
    n2 = 300 * 128
    pred2 = jax.random.normal(k3, (n2,), dtype=jnp.float32)
    tgt2 = jax.random.normal(k4, (n2,), dtype=jnp.float32)
    out2 = jax.block_until_ready(quantile_loss(pred2, tgt2, QUANTILE, block_rows=64))
    assert np.allclose(np.asarray(out2), np.asarray(ref_loss(pred2, tgt2, QUANTILE)),
                       rtol=1e-4, atol=1e-6)

    # 3) Lane-aligned case on the default (large-tile) path, f32.
    n3 = 4096 * 128
    pred3 = jax.random.normal(k1, (n3,), dtype=jnp.float32)
    tgt3 = jax.random.normal(k2, (n3,), dtype=jnp.float32)
    out3 = jax.block_until_ready(quantile_loss(pred3, tgt3, QUANTILE))
    assert np.allclose(np.asarray(out3), np.asarray(ref_loss(pred3, tgt3, QUANTILE)),
                       rtol=1e-4, atol=1e-6)

    # 4) bf16 inputs streamed natively (upcast to f32 only inside the kernel).
    pred4 = pred3.astype(jnp.bfloat16)
    tgt4 = tgt3.astype(jnp.bfloat16)
    out4 = jax.block_until_ready(quantile_loss(pred4, tgt4, QUANTILE))
    assert np.allclose(np.asarray(out4), np.asarray(ref_loss(pred4, tgt4, QUANTILE)),
                       rtol=1e-4, atol=1e-6)

    # 5) Heterogeneous dtypes: f32 prediction vs bf16 target, no wrapper cast.
    out5 = jax.block_until_ready(quantile_loss(pred1, tgt1.astype(jnp.bfloat16), QUANTILE))
    assert np.allclose(np.asarray(out5),
                       np.asarray(ref_loss(pred1, tgt1.astype(jnp.bfloat16), QUANTILE)),
                       rtol=1e-4, atol=1e-6)

    print("KERNEL_OK")
</pallas_src>

<mosaic_0001>
module attributes {stable_mosaic.version = 11 : i64} {
  func.func @_quantile_sums_kernel(%arg0: i32, %arg1: i32, %arg2: memref<16x128xf32, #tpu.memory_space<vmem>>, %arg3: memref<16x128xf32, #tpu.memory_space<vmem>>, %arg4: memref<1x1x128xf32, #tpu.memory_space<vmem>>, %arg5: memref<1x1x128xf32, #tpu.memory_space<vmem>>) attributes {dimension_semantics = [#tpu.dimension_semantics<parallel>, #tpu.dimension_semantics<arbitrary>], iteration_bounds = array<i64: 1, 1>, scalar_prefetch = 0 : i64, scratch_operands = 0 : i64, tpu.core_type = #tpu.core_type<tc>, window_params = [{transform_indices = @transform_0, window_bounds = array<i64: 16, 128>}, {transform_indices = @transform_1, window_bounds = array<i64: 16, 128>}, {transform_indices = @transform_2, window_bounds = array<i64: 1, 1, 128>}, {transform_indices = @transform_3, window_bounds = array<i64: 1, 1, 128>}]} {
    %c0_i32 = arith.constant 0 : i32
    %0 = arith.cmpi eq, %arg1, %c0_i32 : i32
    %1 = arith.extui %0 : i1 to i32
    %c0_i32_0 = arith.constant 0 : i32
    %2 = arith.cmpi ne, %1, %c0_i32_0 : i32
    scf.if %2 {
      %cst_18 = arith.constant 0.000000e+00 : f32
      %24 = vector.broadcast %cst_18 : f32 to vector<1x128xf32>
      %c0_19 = arith.constant 0 : index
      %c0_20 = arith.constant 0 : index
      %c0_21 = arith.constant 0 : index
      %25 = vector.load %arg4[%c0_19, %c0_20, %c0_21] : memref<1x1x128xf32, #tpu.memory_space<vmem>>, vector<1x1x128xf32>
      %26 = vector.shape_cast %25 : vector<1x1x128xf32> to vector<1x128xf32>
      %27 = vector.shape_cast %24 : vector<1x128xf32> to vector<1x1x128xf32>
      tpu.vector_store %arg4[%c0_19, %c0_20, %c0_21], %27 {strides = array<i32>} : memref<1x1x128xf32, #tpu.memory_space<vmem>>, vector<1x1x128xf32>,
      %cst_22 = arith.constant 0.000000e+00 : f32
      %28 = vector.broadcast %cst_22 : f32 to vector<1x128xf32>
      %c0_23 = arith.constant 0 : index
      %c0_24 = arith.constant 0 : index
      %c0_25 = arith.constant 0 : index
      %29 = vector.load %arg5[%c0_23, %c0_24, %c0_25] : memref<1x1x128xf32, #tpu.memory_space<vmem>>, vector<1x1x128xf32>
      %30 = vector.shape_cast %29 : vector<1x1x128xf32> to vector<1x128xf32>
      %31 = vector.shape_cast %28 : vector<1x128xf32> to vector<1x1x128xf32>
      tpu.vector_store %arg5[%c0_23, %c0_24, %c0_25], %31 {strides = array<i32>} : memref<1x1x128xf32, #tpu.memory_space<vmem>>, vector<1x1x128xf32>,
    } else {
    }
    %c0 = arith.constant 0 : index
    %c0_1 = arith.constant 0 : index
    %3 = vector.load %arg2[%c0, %c0_1] : memref<16x128xf32, #tpu.memory_space<vmem>>, vector<16x128xf32>
    %c0_2 = arith.constant 0 : index
    %c0_3 = arith.constant 0 : index
    %4 = vector.load %arg3[%c0_2, %c0_3] : memref<16x128xf32, #tpu.memory_space<vmem>>, vector<16x128xf32>
    %5 = arith.subf %3, %4 : vector<16x128xf32>
    %c0_4 = arith.constant 0 : index
    %c0_5 = arith.constant 0 : index
    %c0_6 = arith.constant 0 : index
    %6 = vector.load %arg4[%c0_4, %c0_5, %c0_6] : memref<1x1x128xf32, #tpu.memory_space<vmem>>, vector<1x1x128xf32>
    %7 = vector.shape_cast %6 : vector<1x1x128xf32> to vector<1x128xf32>
    %cst = arith.constant dense<0.000000e+00> : vector<128xf32>
    %8 = vector.multi_reduction <add>, %5, %cst [0] : vector<16x128xf32> to vector<128xf32>
    %9 = vector.shape_cast %8 : vector<128xf32> to vector<1x128xf32>
    %10 = arith.addf %7, %9 : vector<1x128xf32>
    %c0_7 = arith.constant 0 : index
    %c0_8 = arith.constant 0 : index
    %c0_9 = arith.constant 0 : index
    %11 = vector.load %arg4[%c0_7, %c0_8, %c0_9] : memref<1x1x128xf32, #tpu.memory_space<vmem>>, vector<1x1x128xf32>
    %12 = vector.shape_cast %11 : vector<1x1x128xf32> to vector<1x128xf32>
    %13 = vector.shape_cast %10 : vector<1x128xf32> to vector<1x1x128xf32>
    tpu.vector_store %arg4[%c0_7, %c0_8, %c0_9], %13 {strides = array<i32>} : memref<1x1x128xf32, #tpu.memory_space<vmem>>, vector<1x1x128xf32>,
    %c0_10 = arith.constant 0 : index
    %c0_11 = arith.constant 0 : index
    %c0_12 = arith.constant 0 : index
    %14 = vector.load %arg5[%c0_10, %c0_11, %c0_12] : memref<1x1x128xf32, #tpu.memory_space<vmem>>, vector<1x1x128xf32>
    %15 = vector.shape_cast %14 : vector<1x1x128xf32> to vector<1x128xf32>
    %cst_13 = arith.constant 0.000000e+00 : f32
    %16 = vector.broadcast %cst_13 : f32 to vector<16x128xf32>
    %17 = arith.maximumf %5, %16 : vector<16x128xf32>
    %cst_14 = arith.constant dense<0.000000e+00> : vector<128xf32>
    %18 = vector.multi_reduction <add>, %17, %cst_14 [0] : vector<16x128xf32> to vector<128xf32>
    %19 = vector.shape_cast %18 : vector<128xf32> to vector<1x128xf32>
    %20 = arith.addf %15, %19 : vector<1x128xf32>
    %c0_15 = arith.constant 0 : index
    %c0_16 = arith.constant 0 : index
    %c0_17 = arith.constant 0 : index
    %21 = vector.load %arg5[%c0_15, %c0_16, %c0_17] : memref<1x1x128xf32, #tpu.memory_space<vmem>>, vector<1x1x128xf32>
    %22 = vector.shape_cast %21 : vector<1x1x128xf32> to vector<1x128xf32>
    %23 = vector.shape_cast %20 : vector<1x128xf32> to vector<1x1x128xf32>
    tpu.vector_store %arg5[%c0_15, %c0_16, %c0_17], %23 {strides = array<i32>} : memref<1x1x128xf32, #tpu.memory_space<vmem>>, vector<1x1x128xf32>,
    return
  }
  func.func @transform_0(%arg0: i32, %arg1: i32) -> (i32, i32) {
    %c1_i32 = arith.constant 1 : i32
    %0 = arith.muli %arg0, %c1_i32 : i32
    %1 = arith.addi %0, %arg1 : i32
    %c0_i32 = arith.constant 0 : i32
    %c0_i32_0 = arith.constant 0 : i32
    return %1, %c0_i32 : i32, i32
  }
  func.func @transform_1(%arg0: i32, %arg1: i32) -> (i32, i32) {
    %c1_i32 = arith.constant 1 : i32
    %0 = arith.muli %arg0, %c1_i32 : i32
    %1 = arith.addi %0, %arg1 : i32
    %c0_i32 = arith.constant 0 : i32
    %c0_i32_0 = arith.constant 0 : i32
    return %1, %c0_i32 : i32, i32
  }
  func.func @transform_2(%arg0: i32, %arg1: i32) -> (i32, i32, i32) {
    %c0_i32 = arith.constant 0 : i32
    %c0_i32_0 = arith.constant 0 : i32
    %c0_i32_1 = arith.constant 0 : i32
    return %arg0, %c0_i32, %c0_i32_0 : i32, i32, i32
  }
  func.func @transform_3(%arg0: i32, %arg1: i32) -> (i32, i32, i32) {
    %c0_i32 = arith.constant 0 : i32
    %c0_i32_0 = arith.constant 0 : i32
    %c0_i32_1 = arith.constant 0 : i32
    return %arg0, %c0_i32, %c0_i32_0 : i32, i32, i32
  }
}

</mosaic_0001>

<llo_original>
// kernel: tpu_custom_call.1
$region0: #{tpu_custom_call.1}
  #allocation0 [shape = 'u32[]', space=smem, size = 0x4, offset = 0x4, fixed_abs, tag = 'smem constant byte address 0x4 - core index']
  #allocation1 [shape = 'u32[72,128]{1,0:T(1,128)}', space=vmem, size = 0x9000, scoped, tag = 'internal scratch']
  %s0 = inlined_call_operand.hbm [shape: f32[16,128], index: 0, kind: input, shape index: {}]
  %s1 = inlined_call_operand.hbm [shape: f32[16,128], index: 1, kind: input, shape index: {}]
  %s2 = inlined_call_operand.hbm [shape: f32[1,1,128], index: 2, kind: output, shape index: {0}]
  %s3 = inlined_call_operand.hbm [shape: f32[1,1,128], index: 3, kind: output, shape index: {1}]
  %4 = xla_tuple %s2, %s3
  %s5 = sld [smem:[#allocation0]]
  $region38: #{tpu_custom_call.1} parent=0
    _
  %s7 = ssub.s32 1, %s5
  %s8 = scalar_select 0, %s7, %s5
  $region1: #{tpu_custom_call.1} parent=0
    #allocation2 [shape = 'u8[8192]{0}', space=vmem, size = 0x2000, scoped, tag = 'input window, operand 0, single buffered']
    #allocation3 [shape = 's32[1]{0}', space=sflag, size = 0x4, scoped, tag = 'scoped memory for tpu_custom_call.1']
    #allocation4 [shape = 's32[1]{0}', space=sflag, size = 0x4, scoped, tag = 'scoped memory for tpu_custom_call.1']
    #allocation5 [shape = 'u8[8192]{0}', space=vmem, size = 0x2000, scoped, tag = 'input window, operand 1, single buffered']
    #allocation6 [shape = 's32[1]{0}', space=sflag, size = 0x4, scoped, tag = 'scoped memory for tpu_custom_call.1']
    #allocation7 [shape = 'u8[512]{0}', space=vmem, size = 0x400, scoped, tag = 'output window, operand 0, single buffered']
    #allocation8 [shape = 'u8[512]{0}', space=vmem, size = 0x400, scoped, tag = 'output window, operand 1, single buffered']
    #allocation9 [shape = 's32[1]{0}', space=sflag, size = 0x4, scoped, tag = 'scoped memory for tpu_custom_call.1']
    %9 = vsyncpa [#allocation3], 0
    %10 = vsyncpa [#allocation6], 0
    %11 = vsyncpa [#allocation4], 0
    %12 = vsyncpa [#allocation9], 0
    // Predicated region
    $region2: #{tpu_custom_call.1} parent=1 // pred_check
      _
    $region3: #{tpu_custom_call.1} parent=1 // pred_check_branch
      %14 = sbr.rel (0) target = $region5
    $region4: #{tpu_custom_call.1} parent=1 // pred_region
      %s15 = sadd.s32 0, 0
      %s16 = smul.u32 2, %s15
      %18 = vsyncadd [#allocation3], 0
      %s19 = smul.addr %s16, 8
      %s20 = scalar_lea.hbm %s0, %s19
      %s21 = sshll.u32 %s20, 4
      %s22 = int_to_ptr.hbm [resolvable:$true] %s21
      %s23 = sshll.u32 [#allocation2], 4
      %s24 = int_to_ptr.vmem [resolvable:$true] %s23
      %29 = dma.hbm_to_vmem [thread:$0]  %s22, 256, %s24, [#allocation3], 128, 128, 8
    $region5: #{tpu_custom_call.1} parent=1 // pred_fallthru
      _
    // Predicated region
    $region6: #{tpu_custom_call.1} parent=1 // pred_check
      _
    $region7: #{tpu_custom_call.1} parent=1 // pred_check_branch
      %31 = sbr.rel (0) target = $region9
    $region8: #{tpu_custom_call.1} parent=1 // pred_region
      %s32 = sadd.s32 0, 0
      %s33 = smul.u32 2, %s32
      %35 = vsyncadd [#allocation6], 0
      %s36 = smul.addr %s33, 8
      %s37 = scalar_lea.hbm %s1, %s36
      %s38 = sshll.u32 %s37, 4
      %s39 = int_to_ptr.hbm [resolvable:$true] %s38
      %s40 = sshll.u32 [#allocation5], 4
      %s41 = int_to_ptr.vmem [resolvable:$true] %s40
      %46 = dma.hbm_to_vmem [thread:$0]  %s39, 256, %s41, [#allocation6], 128, 128, 8
    $region9: #{tpu_custom_call.1} parent=1 // pred_fallthru
      _
    // Predicated region
    $region10: #{tpu_custom_call.1} parent=1 // pred_check
      _
    $region11: #{tpu_custom_call.1} parent=1 // pred_check_branch
      %48 = sbr.rel (0) target = $region13
    $region12: #{tpu_custom_call.1} parent=1 // pred_region
      %50 = dma.done [#allocation3], 256
    $region13: #{tpu_custom_call.1} parent=1 // pred_fallthru
      _
    // Predicated region
    $region14: #{tpu_custom_call.1} parent=1 // pred_check
      _
    $region15: #{tpu_custom_call.1} parent=1 // pred_check_branch
      %52 = sbr.rel (0) target = $region17
    $region16: #{tpu_custom_call.1} parent=1 // pred_region
      %54 = dma.done [#allocation6], 256
    $region17: #{tpu_custom_call.1} parent=1 // pred_fallthru
      _
    %s55 = sadd.s32 0, 0
    %s56 = smul.u32 2, %s55
    %s57 = sadd.s32 0, 0
    %s58 = smul.u32 2, %s57
    %p59 = scmp.eq.s32.totalorder 0, 0
    // Predicated region
    $region18: #{tpu_custom_call.1} parent=1 // pred_check
      %p60 = pneg %p59
    $region19: #{tpu_custom_call.1} parent=1 // pred_check_branch
      %62 = sbr.rel (%p60) target = $region21
    $region20: #{tpu_custom_call.1} parent=1 // pred_region
      %63 = vst [vmem:[#allocation7] sm:$0x1] 0.0
      %64 = vst [vmem:[#allocation8] sm:$0x1] 0.0
    $region21: #{tpu_custom_call.1} parent=1 // pred_fallthru
      _
    %v65 = vld [vmem:[#allocation2] sm:$0xff]
    %v66 = vld [vmem:[#allocation2 + $0x8] sm:$0xff]
    %v67 = vld [vmem:[#allocation5] sm:$0xff]
    %v68 = vld [vmem:[#allocation5 + $0x8] sm:$0xff]
    %v69 = vsub.f32 %v65, %v67
    %v70 = vsub.f32 %v66, %v68
    %v71 = vld [vmem:[#allocation7] sm:$0x1]
    %v72 = vadd.f32 %v69, %v70
    %v73 = vrot.slane %v72, 4
    %v74 = vadd.f32 %v72, %v73
    %v75 = vrot.slane %v74, 2
    %v76 = vadd.f32 %v74, %v75
    %v77 = vrot.slane %v76, 1
    %v78 = vadd.f32 %v76, %v77
    %v79 = vadd.f32 %v71, %v78
    %80 = vst [vmem:[#allocation7] sm:$0x1] %v79
    %v81 = vld [vmem:[#allocation8] sm:$0x1]
    %v82 = vmax.f32 %v69, 0.0
    %v83 = vmax.f32 %v70, 0.0
    %v84 = vadd.f32 %v82, %v83
    %v85 = vrot.slane %v84, 4
    %v86 = vadd.f32 %v84, %v85
    %v87 = vrot.slane %v86, 2
    %v88 = vadd.f32 %v86, %v87
    %v89 = vrot.slane %v88, 1
    %v90 = vadd.f32 %v88, %v89
    %v91 = vadd.f32 %v81, %v90
    %92 = vst [vmem:[#allocation8] sm:$0x1] %v91
    // Predicated region
    $region22: #{tpu_custom_call.1} parent=1 // pred_check
      _
    $region23: #{tpu_custom_call.1} parent=1 // pred_check_branch
      %94 = sbr.rel (0) target = $region25
    $region24: #{tpu_custom_call.1} parent=1 // pred_region
      %96 = vsyncadd [#allocation4], 0
      %s98 = sshll.u32 [#allocation7], 4
      %s99 = int_to_ptr.vmem [resolvable:$true] %s98
      %s100 = sshll.u32 %s2, 4
      %s101 = int_to_ptr.hbm [resolvable:$true] %s100
      %103 = dma.vmem_to_hbm [thread:$0]  %s99, 16, %s101, [#allocation4]
    $region25: #{tpu_custom_call.1} parent=1 // pred_fallthru
      _
    // Predicated region
    $region26: #{tpu_custom_call.1} parent=1 // pred_check
      _
    $region27: #{tpu_custom_call.1} parent=1 // pred_check_branch
      %105 = sbr.rel (0) target = $region29
    $region28: #{tpu_custom_call.1} parent=1 // pred_region
      %107 = vsyncadd [#allocation9], 0
      %s109 = sshll.u32 [#allocation8], 4
      %s110 = int_to_ptr.vmem [resolvable:$true] %s109
      %s111 = sshll.u32 %s3, 4
      %s112 = int_to_ptr.hbm [resolvable:$true] %s111
      %114 = dma.vmem_to_hbm [thread:$0]  %s110, 16, %s112, [#allocation9]
    $region29: #{tpu_custom_call.1} parent=1 // pred_fallthru
      _
    // Predicated region
    $region30: #{tpu_custom_call.1} parent=1 // pred_check
      _
    $region31: #{tpu_custom_call.1} parent=1 // pred_check_branch
      %116 = sbr.rel (0) target = $region33
    $region32: #{tpu_custom_call.1} parent=1 // pred_region
      %118 = dma.done [#allocation4], 16
    $region33: #{tpu_custom_call.1} parent=1 // pred_fallthru
      _
    // Predicated region
    $region34: #{tpu_custom_call.1} parent=1 // pred_check
      _
    $region35: #{tpu_custom_call.1} parent=1 // pred_check_branch
      %120 = sbr.rel (0) target = $region37
    $region36: #{tpu_custom_call.1} parent=1 // pred_region
      %122 = dma.done [#allocation9], 16
    $region37: #{tpu_custom_call.1} parent=1 // pred_fallthru
      _
    %123 = vsyncpa [#allocation3], 1
    %124 = vsyncpa [#allocation6], 1
    %125 = vsyncpa [#allocation4], 1
    %126 = vsyncpa [#allocation9], 1

</llo_original>
